<compile_context>
chip_gen: v5e
topology: v5e:2x2
jax: 0.10.0
libtpu: 0.0.40
codegen_flags: <defaults>
</compile_context>

<pallas_src>
import collections
import functools

import numpy as np
import jax
import jax.numpy as jnp
from jax.experimental import pallas as pl
from jax.experimental.pallas import tpu as pltpu


# ---------------------------------------------------------------------------
# helpers
# ---------------------------------------------------------------------------
def _round_up(x, m):
    return (x + m - 1) // m * m


def _choose_row_tile(n):
    for tm in (512, 256, 128):
        if n >= tm:
            return tm
    return _round_up(max(n, 8), 8)


# ---------------------------------------------------------------------------
# Pallas kernel: fused (x @ W^T + b) and MSE vs pseudo labels, tiled over rows.
# ---------------------------------------------------------------------------
def _mse_linear_kernel(x_ref, wt_ref, b_ref, pseudo_ref, out_ref, acc_ref,
                       *, n_true, c_true, tm, mask_rows):
    i = pl.program_id(0)

    @pl.when(i == 0)
    def _init():
        acc_ref[0, 0] = jnp.float32(0.0)

    # (TM, H) @ (H, C) on the MXU with f32 accumulation; bias/diff on the VPU.
    y = jnp.dot(x_ref[...], wt_ref[...], preferred_element_type=jnp.float32)
    diff = (y + b_ref[...]) - pseudo_ref[...]

    if mask_rows:
        # Last tile is ragged: rows >= n_true come from an out-of-bounds block
        # read (unspecified values) and must not contribute to the loss.
        row_ids = i * tm + jax.lax.broadcasted_iota(jnp.int32, diff.shape, 0)
        diff = jnp.where(row_ids < n_true, diff, 0.0)

    acc_ref[0, 0] += jnp.sum(diff * diff)

    @pl.when(i == pl.num_programs(0) - 1)
    def _finalize():
        out_ref[0, 0] = acc_ref[0, 0] / jnp.float32(n_true * c_true)


@jax.jit
def distance_cluster_loss(embeddings, weight, bias, pseudo_labels):
    """mean((embeddings @ weight.T + bias - pseudo_labels)**2) via Pallas."""
    n, nhid = embeddings.shape
    c = pseudo_labels.shape[1]

    tm = _choose_row_tile(n)            # row tile (multiple of 8)
    grid_m = pl.cdiv(n, tm)
    mask_rows = (n % tm) != 0           # only the ragged last tile needs masking

    f32 = jnp.float32
    x = embeddings.astype(f32)                       # (N, H)
    wt = weight.astype(f32).T                        # (H, C)  tiny, one-time transpose
    b = bias.astype(f32).reshape(1, c)               # (1, C)
    p = pseudo_labels.astype(f32)                    # (N, C)

    # VMEM budget: double-buffered x / pseudo row tiles + resident W^T, bias.
    buf_bytes = 4 * (2 * tm * (nhid + c) + nhid * c + c)
    vmem_limit = int(min(max(4 * buf_bytes, 8 << 20), 64 << 20))

    cost = pl.CostEstimate(
        flops=2 * n * nhid * c,
        transcendentals=0,
        bytes_accessed=4 * (n * nhid + n * c + nhid * c + c + 1),
    )

    out = pl.pallas_call(
        functools.partial(_mse_linear_kernel, n_true=n, c_true=c, tm=tm,
                          mask_rows=mask_rows),
        out_shape=jax.ShapeDtypeStruct((1, 1), f32),
        grid_spec=pltpu.PrefetchScalarGridSpec(
            num_scalar_prefetch=0,
            grid=(grid_m,),
            in_specs=[
                pl.BlockSpec((tm, nhid), lambda i: (i, 0)),   # embeddings tile
                pl.BlockSpec((nhid, c), lambda i: (0, 0)),    # W^T (VMEM-resident)
                pl.BlockSpec((1, c), lambda i: (0, 0)),       # bias (VMEM-resident)
                pl.BlockSpec((tm, c), lambda i: (i, 0)),      # pseudo-label tile
            ],
            out_specs=pl.BlockSpec((1, 1), lambda i: (0, 0),
                                   memory_space=pltpu.SMEM),
            scratch_shapes=[pltpu.SMEM((1, 1), f32)],
        ),
        compiler_params=pltpu.CompilerParams(
            dimension_semantics=("arbitrary",),   # scalar accumulation across tiles
            vmem_limit_bytes=vmem_limit,
        ),
        cost_estimate=cost,
    )(x, wt, b, p)
    return out[0, 0]


# ---------------------------------------------------------------------------
# Host-side clustering preprocessing (init-time, not a kernel).
# ---------------------------------------------------------------------------
class ClusteringMachine:
    """Deterministic stand-in for the METIS-based ClusteringMachine."""

    # TODO(synk): the original uses pymetis.part_graph + networkx for graph
    # partitioning; no Pallas/JAX equivalent exists, so nodes are partitioned
    # into contiguous index blocks here.  Central-node selection (max
    # intra-cluster degree) and the BFS 1/depth distance matrix follow the
    # original logic.

    def __init__(self, adj, nclass):
        self.adj = np.asarray(adj) != 0
        np.fill_diagonal(self.adj, False)
        self.n = self.adj.shape[0]
        self.nclass = int(nclass)

    def decompose(self):
        parts = self._partition()
        central = self._central_nodes(parts)
        self.dis_matrix = jnp.asarray(self._distance_matrix(central),
                                      dtype=jnp.float32)

    def _partition(self):
        return np.minimum(np.arange(self.n) * self.nclass // self.n,
                          self.nclass - 1)

    def _central_nodes(self, parts):
        central = []
        for c in range(self.nclass):
            nodes = np.nonzero(parts == c)[0]
            if nodes.size == 0:
                central.append(0)
                continue
            sub = self.adj[np.ix_(nodes, nodes)]
            deg = sub.sum(axis=1)
            central.append(int(nodes[int(np.argmax(deg))]))
        return central

    def _distance_matrix(self, central):
        dis = np.zeros((self.n, self.nclass), dtype=np.float32)
        for c, src in enumerate(central):
            depth = np.full(self.n, -1, dtype=np.int64)
            depth[src] = 0
            frontier = collections.deque([src])
            while frontier:
                u = frontier.popleft()
                for v in np.nonzero(self.adj[u])[0]:
                    if depth[v] < 0:
                        depth[v] = depth[u] + 1
                        frontier.append(int(v))
            reach = depth > 0
            dis[reach, c] = 1.0 / depth[reach]      # 1/depth transform, -1 -> 0
        return dis


class DistanceCluster:
    """JAX/Pallas port of the PyTorch DistanceCluster module."""

    def __init__(self, nhid, adj, clu_nclass, key):
        k_w, k_b = jax.random.split(key)
        bound = 1.0 / float(np.sqrt(nhid))
        # PyTorch nn.Linear default init: U(-1/sqrt(fan_in), 1/sqrt(fan_in)).
        self.weight = jax.random.uniform(k_w, (clu_nclass, nhid), jnp.float32,
                                         -bound, bound)
        self.bias = jax.random.uniform(k_b, (clu_nclass,), jnp.float32,
                                       -bound, bound)
        self.cluster_agent = ClusteringMachine(np.asarray(adj), clu_nclass)
        self.cluster_agent.decompose()
        self.pseudo_labels = self.cluster_agent.dis_matrix     # (N, clu_nclass)

    def forward(self, embeddings):
        return distance_cluster_loss(embeddings, self.weight, self.bias,
                                     self.pseudo_labels)


def _ref_forward(embeddings, weight, bias, pseudo):
    out = embeddings @ weight.T + bias
    return jnp.mean((out - pseudo) ** 2)


if __name__ == "__main__":
    N, nhid, clu_nclass = 64, 32, 8

    key = jax.random.PRNGKey(0)
    k_adj, k_emb, k_model = jax.random.split(key, 3)

    # Deterministic synthetic graph: sparse symmetric 0/1 adjacency, no loops.
    a = (jax.random.uniform(k_adj, (N, N)) < 0.15).astype(jnp.float32)
    a = jnp.minimum(a + a.T, 1.0)
    a = a * (1.0 - jnp.eye(N, dtype=jnp.float32))
    adj = np.asarray(a)

    embeddings = jax.random.normal(k_emb, (N, nhid), dtype=jnp.float32)

    model = DistanceCluster(nhid, adj, clu_nclass, k_model)

    loss = model.forward(embeddings)
    jax.block_until_ready(loss)

    # Correctness check against a pure-JAX reference of the same math.
    ref = _ref_forward(embeddings, model.weight, model.bias, model.pseudo_labels)
    assert jnp.allclose(loss, ref, atol=1e-4, rtol=1e-3), (loss, ref)

    print("KERNEL_OK")
</pallas_src>

<mosaic_0001>
module attributes {stable_mosaic.version = 11 : i64} {
  func.func @_mse_linear_kernel(%arg0: i32, %arg1: memref<64x32xf32, #tpu.memory_space<vmem>>, %arg2: memref<32x8xf32, #tpu.memory_space<vmem>>, %arg3: memref<1x8xf32, #tpu.memory_space<vmem>>, %arg4: memref<64x8xf32, #tpu.memory_space<vmem>>, %arg5: memref<1x1xf32, #tpu.memory_space<smem>>, %arg6: memref<1x1xf32, #tpu.memory_space<smem>>) attributes {dimension_semantics = [#tpu.dimension_semantics<arbitrary>], iteration_bounds = array<i64: 1>, scalar_prefetch = 0 : i64, scratch_operands = 1 : i64, tpu.core_type = #tpu.core_type<tc>, window_params = [{transform_indices = @transform_0, window_bounds = array<i64: 64, 32>}, {pipeline_mode = #tpu.pipeline_mode<synchronous>, transform_indices = @transform_1, window_bounds = array<i64: 32, 8>}, {pipeline_mode = #tpu.pipeline_mode<synchronous>, transform_indices = @transform_2, window_bounds = array<i64: 1, 8>}, {transform_indices = @transform_3, window_bounds = array<i64: 64, 8>}, {transform_indices = @transform_4, window_bounds = array<i64: 1, 1>}]} {
    %c0_i32 = arith.constant 0 : i32
    %0 = arith.cmpi eq, %arg0, %c0_i32 : i32
    %1 = arith.extui %0 : i1 to i32
    %c0_i32_0 = arith.constant 0 : i32
    %2 = arith.cmpi ne, %1, %c0_i32_0 : i32
    scf.if %2 {
      %cst_15 = arith.constant 0.000000e+00 : f32
      %c0_16 = arith.constant 0 : index
      %c0_17 = arith.constant 0 : index
      %22 = memref.load %arg6[%c0_16, %c0_17] : memref<1x1xf32, #tpu.memory_space<smem>>
      memref.store %cst_15, %arg6[%c0_16, %c0_17] : memref<1x1xf32, #tpu.memory_space<smem>>
    } else {
    }
    %c0 = arith.constant 0 : index
    %c0_1 = arith.constant 0 : index
    %3 = vector.load %arg1[%c0, %c0_1] : memref<64x32xf32, #tpu.memory_space<vmem>>, vector<64x32xf32>
    %c0_2 = arith.constant 0 : index
    %c0_3 = arith.constant 0 : index
    %4 = vector.load %arg2[%c0_2, %c0_3] : memref<32x8xf32, #tpu.memory_space<vmem>>, vector<32x8xf32>
    %cst = arith.constant dense<0.000000e+00> : vector<64x8xf32>
    %5 = tpu.matmul %3, %4, %cst {dimension_numbers = #tpu.dot_dimension_numbers<[1], [0], [0], [1], [0, 0, 1, 1], [], []>} : vector<64x32xf32>, vector<32x8xf32>, vector<64x8xf32> -> vector<64x8xf32>
    %c0_4 = arith.constant 0 : index
    %c0_5 = arith.constant 0 : index
    %6 = vector.load %arg3[%c0_4, %c0_5] : memref<1x8xf32, #tpu.memory_space<vmem>>, vector<1x8xf32>
    %7 = vector.broadcast %6 : vector<1x8xf32> to vector<64x8xf32>
    %8 = arith.addf %5, %7 : vector<64x8xf32>
    %c0_6 = arith.constant 0 : index
    %c0_7 = arith.constant 0 : index
    %9 = vector.load %arg4[%c0_6, %c0_7] : memref<64x8xf32, #tpu.memory_space<vmem>>, vector<64x8xf32>
    %10 = arith.subf %8, %9 : vector<64x8xf32>
    %c0_8 = arith.constant 0 : index
    %c0_9 = arith.constant 0 : index
    %11 = memref.load %arg6[%c0_8, %c0_9] : memref<1x1xf32, #tpu.memory_space<smem>>
    %12 = arith.mulf %10, %10 : vector<64x8xf32>
    %13 = vector.shape_cast %12 : vector<64x8xf32> to vector<1x64x8xf32>
    %cst_10 = arith.constant dense<0.000000e+00> : vector<1xf32>
    %14 = vector.multi_reduction <add>, %13, %cst_10 [1, 2] : vector<1x64x8xf32> to vector<1xf32>
    %15 = vector.shape_cast %14 : vector<1xf32> to vector<1x1x1xf32>
    %16 = vector.extract %15[0, 0, 0] : f32 from vector<1x1x1xf32>
    %17 = arith.addf %11, %16 : f32
    %c0_11 = arith.constant 0 : index
    %c0_12 = arith.constant 0 : index
    %18 = memref.load %arg6[%c0_11, %c0_12] : memref<1x1xf32, #tpu.memory_space<smem>>
    memref.store %17, %arg6[%c0_11, %c0_12] : memref<1x1xf32, #tpu.memory_space<smem>>
    %c0_i32_13 = arith.constant 0 : i32
    %19 = arith.cmpi eq, %arg0, %c0_i32_13 : i32
    %20 = arith.extui %19 : i1 to i32
    %c0_i32_14 = arith.constant 0 : i32
    %21 = arith.cmpi ne, %20, %c0_i32_14 : i32
    scf.if %21 {
      %c0_15 = arith.constant 0 : index
      %c0_16 = arith.constant 0 : index
      %22 = memref.load %arg6[%c0_15, %c0_16] : memref<1x1xf32, #tpu.memory_space<smem>>
      %cst_17 = arith.constant 5.120000e+02 : f32
      %23 = arith.divf %22, %cst_17 : f32
      %c0_18 = arith.constant 0 : index
      %c0_19 = arith.constant 0 : index
      %24 = memref.load %arg5[%c0_18, %c0_19] : memref<1x1xf32, #tpu.memory_space<smem>>
      memref.store %23, %arg5[%c0_18, %c0_19] : memref<1x1xf32, #tpu.memory_space<smem>>
    } else {
    }
    return
  }
  func.func @transform_0(%arg0: i32) -> (i32, i32) {
    %c0_i32 = arith.constant 0 : i32
    %c0_i32_0 = arith.constant 0 : i32
    return %arg0, %c0_i32 : i32, i32
  }
  func.func @transform_1(%arg0: i32) -> (i32, i32) {
    %c0_i32 = arith.constant 0 : i32
    %c0_i32_0 = arith.constant 0 : i32
    %c0_i32_1 = arith.constant 0 : i32
    return %c0_i32, %c0_i32_0 : i32, i32
  }
  func.func @transform_2(%arg0: i32) -> (i32, i32) {
    %c0_i32 = arith.constant 0 : i32
    %c0_i32_0 = arith.constant 0 : i32
    %c0_i32_1 = arith.constant 0 : i32
    return %c0_i32, %c0_i32_0 : i32, i32
  }
  func.func @transform_3(%arg0: i32) -> (i32, i32) {
    %c0_i32 = arith.constant 0 : i32
    %c0_i32_0 = arith.constant 0 : i32
    return %arg0, %c0_i32 : i32, i32
  }
  func.func @transform_4(%arg0: i32) -> (i32, i32) {
    %c0_i32 = arith.constant 0 : i32
    %c0_i32_0 = arith.constant 0 : i32
    %c0_i32_1 = arith.constant 0 : i32
    return %c0_i32, %c0_i32_0 : i32, i32
  }
}

</mosaic_0001>

<llo_original>
// kernel: distance_cluster_loss.1
$region0: #{distance_cluster_loss.1}
  #allocation0 [shape = 'u32[]', space=smem, size = 0x4, offset = 0x4, fixed_abs, tag = 'smem constant byte address 0x4 - core index']
  #allocation1 [shape = 'u32[72,128]{1,0:T(1,128)}', space=vmem, size = 0x9000, scoped, tag = 'internal scratch']
  #allocation2 [shape = 'f32[1,1]{1,0:T(1,128)}', space=smem, size = 0x200, scoped, tag = 'scratch operand']
  %s0 = inlined_call_operand.vmem [shape: f32[64,32], index: 0, kind: input, shape index: {}]
  %s1 = inlined_call_operand.vmem [shape: f32[32,8], index: 1, kind: input, shape index: {}]
  %s2 = inlined_call_operand.vmem [shape: f32[1,8], index: 2, kind: input, shape index: {}]
  %s3 = inlined_call_operand.vmem [shape: f32[64,8], index: 3, kind: input, shape index: {}]
  %s4 = inlined_call_operand.hbm [shape: f32[1,1], index: 4, kind: output, shape index: {}]
  %s5 = sld [smem:[#allocation0]]
  $region34: #{distance_cluster_loss.1} parent=0
    _
  %s7 = ssub.s32 1, %s5
  %s8 = scalar_select 0, %s7, %s5
  $region1: #{distance_cluster_loss.1} parent=0
    #allocation3 [shape = 'u8[512]{0}', space=smem, size = 0x200, scoped, tag = 'output window, operand 0, single buffered']
    #allocation4 [shape = 's32[1]{0}', space=sflag, size = 0x4, scoped, tag = 'scoped memory for distance_cluster_loss.1']
    %9 = vsyncpa [#allocation4], 0
    // Predicated region
    $region2: #{distance_cluster_loss.1} parent=1 // pred_check
      _
    $region3: #{distance_cluster_loss.1} parent=1 // pred_check_branch
      %11 = sbr.rel (0) target = $region5
    $region4: #{distance_cluster_loss.1} parent=1 // pred_region
      _
    $region5: #{distance_cluster_loss.1} parent=1 // pred_fallthru
      _
    // Predicated region
    $region6: #{distance_cluster_loss.1} parent=1 // pred_check
      _
    $region7: #{distance_cluster_loss.1} parent=1 // pred_check_branch
      %13 = sbr.rel (0) target = $region9
    $region8: #{distance_cluster_loss.1} parent=1 // pred_region
      _
    $region9: #{distance_cluster_loss.1} parent=1 // pred_fallthru
      _
    // Predicated region
    $region10: #{distance_cluster_loss.1} parent=1 // pred_check
      _
    $region11: #{distance_cluster_loss.1} parent=1 // pred_check_branch
      %15 = sbr.rel (0) target = $region13
    $region12: #{distance_cluster_loss.1} parent=1 // pred_region
      _
    $region13: #{distance_cluster_loss.1} parent=1 // pred_fallthru
      _
    // Predicated region
    $region14: #{distance_cluster_loss.1} parent=1 // pred_check
      _
    $region15: #{distance_cluster_loss.1} parent=1 // pred_check_branch
      %17 = sbr.rel (0) target = $region17
    $region16: #{distance_cluster_loss.1} parent=1 // pred_region
      _
    $region17: #{distance_cluster_loss.1} parent=1 // pred_fallthru
      _
    %p18 = scmp.eq.s32.totalorder 0, 0
    // Predicated region
    $region18: #{distance_cluster_loss.1} parent=1 // pred_check
      %p19 = pneg %p18
    $region19: #{distance_cluster_loss.1} parent=1 // pred_check_branch
      %21 = sbr.rel (%p19) target = $region21
    $region20: #{distance_cluster_loss.1} parent=1 // pred_region
      %s22 = scalar_lea.smem [#allocation2], 0
      %23 = sst [smem:[%s22]] 0.0
    $region21: #{distance_cluster_loss.1} parent=1 // pred_fallthru
      _
    %v24 = vld [vmem:[%s0] sm:$0xff]
    %v25 = vld [vmem:[%s0 + $0x8] sm:$0xff]
    %v26 = vld [vmem:[%s0 + $0x10] sm:$0xff]
    %v27 = vld [vmem:[%s0 + $0x18] sm:$0xff]
    %v28 = vld [vmem:[%s0 + $0x20] sm:$0xff]
    %v29 = vld [vmem:[%s0 + $0x28] sm:$0xff]
    %v30 = vld [vmem:[%s0 + $0x30] sm:$0xff]
    %v31 = vld [vmem:[%s0 + $0x38] sm:$0xff]
    %v32 = vld [vmem:[%s1] sm:$0xff]
    %v33 = vld [vmem:[%s1 + $0x8] sm:$0xff]
    %v34 = vld [vmem:[%s1 + $0x10] sm:$0xff]
    %v35 = vld [vmem:[%s1 + $0x18] sm:$0xff]
    %v36 = vld [vmem:[%s2] sm:$0x1]
    %v38 = vperm.slane %v36, 0
    %vm40 = vcmask 261120
    %v42 = vsel %vm40, %v24, 0
    %v45 = vsel %vm40, %v25, 0
    %v48 = vsel %vm40, %v26, 0
    %v51 = vsel %vm40, %v27, 0
    %v54 = vsel %vm40, %v28, 0
    %v57 = vsel %vm40, %v29, 0
    %v60 = vsel %vm40, %v30, 0
    %v63 = vsel %vm40, %v31, 0
    %65 = vmatpush.msra.mxu0 0.0
    %66 = vmatpush.msra.mxu0 0.0
    %67 = vmatpush.msra.mxu0 0.0
    %68 = vmatpush.msra.mxu0 0.0
    %69 = vmatpush.msra.mxu0 0.0
    %70 = vmatpush.msra.mxu0 0.0
    %71 = vmatpush.msra.mxu0 0.0
    %72 = vmatpush.msra.mxu0 0.0
    %73 = vmatpush.msra.mxu0 0.0
    %74 = vmatpush.msra.mxu0 0.0
    %75 = vmatpush.msra.mxu0 0.0
    %76 = vmatpush.msra.mxu0 0.0
    %77 = vmatpush.msra.mxu0 %v35
    %78 = vmatpush.msra.mxu0 %v34
    %79 = vmatpush.msra.mxu0 %v33
    %80 = vmatpush.msra.mxu0 %v32
    %81 = vmatmul.f32.gmra.mxu0 %v42
    %v82 = vpop.f32.mrf.mxu0
    %v83 = vadd.f32 %v38, %v82
    %84 = vmatmul.f32.gmra.mxu0 %v45
    %v85 = vpop.f32.mrf.mxu0
    %v86 = vadd.f32 %v38, %v85
    %87 = vmatmul.f32.gmra.mxu0 %v48
    %v88 = vpop.f32.mrf.mxu0
    %v89 = vadd.f32 %v38, %v88
    %90 = vmatmul.f32.gmra.mxu0 %v51
    %v91 = vpop.f32.mrf.mxu0
    %v92 = vadd.f32 %v38, %v91
    %93 = vmatmul.f32.gmra.mxu0 %v54
    %v94 = vpop.f32.mrf.mxu0
    %v95 = vadd.f32 %v38, %v94
    %96 = vmatmul.f32.gmra.mxu0 %v57
    %v97 = vpop.f32.mrf.mxu0
    %v98 = vadd.f32 %v38, %v97
    %99 = vmatmul.f32.gmra.mxu0 %v60
    %v100 = vpop.f32.mrf.mxu0
    %v101 = vadd.f32 %v38, %v100
    %102 = vmatmul.f32.gmra.mxu0 %v63
    %v103 = vpop.f32.mrf.mxu0
    %v104 = vadd.f32 %v38, %v103
    %105 = vdwg.mxu0
    %v106 = vld [vmem:[%s3] sm:$0xff]
    %v107 = vld [vmem:[%s3 + $0x8] sm:$0xff]
    %v108 = vld [vmem:[%s3 + $0x10] sm:$0xff]
    %v109 = vld [vmem:[%s3 + $0x18] sm:$0xff]
    %v110 = vld [vmem:[%s3 + $0x20] sm:$0xff]
    %v111 = vld [vmem:[%s3 + $0x28] sm:$0xff]
    %v112 = vld [vmem:[%s3 + $0x30] sm:$0xff]
    %v113 = vld [vmem:[%s3 + $0x38] sm:$0xff]
    %v114 = vsub.f32 %v83, %v106
    %v115 = vsub.f32 %v86, %v107
    %v116 = vsub.f32 %v89, %v108
    %v117 = vsub.f32 %v92, %v109
    %v118 = vsub.f32 %v95, %v110
    %v119 = vsub.f32 %v98, %v111
    %v120 = vsub.f32 %v101, %v112
    %v121 = vsub.f32 %v104, %v113
    %s122 = sld [smem:[#allocation2]]
    %v123 = vmul.f32 %v114, %v114
    %v124 = vmul.f32 %v115, %v115
    %v125 = vmul.f32 %v116, %v116
    %v126 = vmul.f32 %v117, %v117
    %v127 = vmul.f32 %v118, %v118
    %v128 = vmul.f32 %v119, %v119
    %v129 = vmul.f32 %v120, %v120
    %v130 = vmul.f32 %v121, %v121
    %vm131 = vcmask 64512
    %v132 = vsel %vm131, %v123, 0.0
    %v133 = vsel %vm131, %v124, 0.0
    %v134 = vadd.f32 %v132, %v133
    %v135 = vsel %vm131, %v125, 0.0
    %v136 = vadd.f32 %v134, %v135
    %v137 = vsel %vm131, %v126, 0.0
    %v138 = vadd.f32 %v136, %v137
    %v139 = vsel %vm131, %v127, 0.0
    %v140 = vadd.f32 %v138, %v139
    %v141 = vsel %vm131, %v128, 0.0
    %v142 = vadd.f32 %v140, %v141
    %v143 = vsel %vm131, %v129, 0.0
    %v144 = vadd.f32 %v142, %v143
    %v145 = vsel %vm131, %v130, 0.0
    %v146 = vadd.f32 %v144, %v145
    %147 = vadd.xlane.f32.xlu0 %v146
    %v148 = vpop.xlane.xlu0 %147
    %v149 = vrot.slane %v148, 4
    %v150 = vadd.f32 %v148, %v149
    %v151 = vrot.slane %v150, 2
    %v152 = vadd.f32 %v150, %v151
    %v153 = vrot.slane %v152, 1
    %v154 = vadd.f32 %v152, %v153
    %s155 = vtos %v154
    %s156 = sadd.f32 %s122, %s155
    %s157 = scalar_lea.smem [#allocation2], 0
    %158 = sst [smem:[%s157]] %s156
    // Predicated region
    $region22: #{distance_cluster_loss.1} parent=1 // pred_check
      %p159 = pneg %p18
    $region23: #{distance_cluster_loss.1} parent=1 // pred_check_branch
      %161 = sbr.rel (%p159) target = $region25
    $region24: #{distance_cluster_loss.1} parent=1 // pred_region
      %s162 = sld [smem:[#allocation2]]
      %v163 = vrcp.pop 512.0
      %v164 = vmul.f32 512.0, %v163
      %v165 = vsub.f32 1.0, %v164
      %v166 = vmul.f32 %v163, %v165
      %v167 = vadd.f32 %v163, %v166
      %vm168 = vweird.f32 %v163
      %v169 = vsel %vm168, %v163, %v167
      %s170 = vtos %v169
      %s171 = smul.f32 %s162, %s170
      %s172 = scalar_lea.smem [#allocation3], 0
      %173 = sst [smem:[%s172]] %s171
    $region25: #{distance_cluster_loss.1} parent=1 // pred_fallthru
      _
    // Predicated region
    $region26: #{distance_cluster_loss.1} parent=1 // pred_check
      _
    $region27: #{distance_cluster_loss.1} parent=1 // pred_check_branch
      %175 = sbr.rel (0) target = $region29
    $region28: #{distance_cluster_loss.1} parent=1 // pred_region
      %177 = vsyncadd [#allocation4], 0
      %s179 = sshll.u32 %s4, 4
      %s180 = int_to_ptr.hbm [resolvable:$true] %s179
      %182 = dma.smem_to_hbm [#allocation3], 16, %s180, [#allocation4]
    $region29: #{distance_cluster_loss.1} parent=1 // pred_fallthru
      _
    // Predicated region
    $region30: #{distance_cluster_loss.1} parent=1 // pred_check
      _
    $region31: #{distance_cluster_loss.1} parent=1 // pred_check_branch
      %184 = sbr.rel (0) target = $region33
    $region32: #{distance_cluster_loss.1} parent=1 // pred_region
      %186 = dma.done [#allocation4], 16
    $region33: #{distance_cluster_loss.1} parent=1 // pred_fallthru
      _
    %187 = sfence
    %188 = vsyncpa [#allocation4], 1

</llo_original>
